<compile_context>
chip_gen: v5e
topology: v5e:2x2
jax: 0.10.0
libtpu: 0.0.40
codegen_flags: <defaults>
</compile_context>

<pallas_src>
import jax
import jax.numpy as jnp
from jax.experimental import pallas as pl
from jax.experimental.pallas import tpu as pltpu


def _vmem_capacity_bytes():
    try:
        return int(pltpu.get_tpu_info().vmem_capacity_bytes)
    except Exception:
        return 64 * 1024 * 1024          # conservative default (v7x per-core VMEM)


def _choose_mode_tile(B, I, O2, M):
    """Mode-tile size (lane axis), grid extent and a VMEM limit for this call."""
    cap = _vmem_capacity_bytes()
    budget = cap // 4                    # double-buffered working-set budget
    # Bytes per mode column, double buffered: f32 xr/xi, bf16 wr/wi, f32 out_r/out_i.
    per_col = 2 * (2 * B * I * 4 + 2 * I * O2 * 2 + 2 * B * O2 * 4)
    if M <= 128:
        mt = M                           # full axis is always a legal block shape
    else:
        max_cols = max(128, (budget // per_col) // 128 * 128)   # multiple of 128
        mt = min(max_cols, (M // 128) * 128)
        # mt need not divide M: Pallas masks the ragged final block.
    n_mt = pl.cdiv(M, mt)
    work_set = per_col * mt
    # Guard: always leave room for at least one double-buffered tile.
    vmem_limit = min(int(cap * 0.9), max(3 * cap // 4, work_set + (2 << 20)))
    return mt, n_mt, vmem_limit


def _spectral_kernel(xr_ref, xi_ref, wr_ref, wi_ref, or_ref, oi_ref):
    """One (mode-tile, x-block) grid step, VPU broadcast-FMA formulation.

    xr/xi : (B, I, Mt)   f32    spectral coefficients, modes on the lane axis
    wr/wi : (I, 2O, Mt)  bf16   fused weights ([w1|w3] or [w2|w4])
    or/oi : (B, 2O, Mt)  f32    real / imag outputs (no lane padding)
    """
    B, I, Mt = xr_ref.shape
    O2 = wr_ref.shape[1]
    xr = xr_ref[...]
    xi = xi_ref[...]
    wr = wr_ref[...].astype(jnp.float32)
    wi = wi_ref[...].astype(jnp.float32)
    acc_r = jnp.zeros((B, O2, Mt), jnp.float32)
    acc_i = jnp.zeros((B, O2, Mt), jnp.float32)
    for i in range(I):                       # I is small & static: unrolled FMAs
        xr_i = xr[:, i:i + 1, :]             # (B, 1, Mt)
        xi_i = xi[:, i:i + 1, :]
        wr_i = wr[i:i + 1, :, :]             # (1, 2O, Mt)
        wi_i = wi[i:i + 1, :, :]
        acc_r = acc_r + xr_i * wr_i - xi_i * wi_i
        acc_i = acc_i + xr_i * wi_i + xi_i * wr_i
    or_ref[...] = acc_r
    oi_ref[...] = acc_i


def _spectral_complex_mul(xr, xi, wr_packed, wi_packed):
    """xr, xi:        (2, B, I, M)  f32   (block 0 = top rows, 1 = bottom rows)
       wr/wi_packed:  (2, I, 2O, M) bf16  (block 0 = [w1|w3], block 1 = [w2|w4])
       returns (out_r, out_i), each (2, B, 2O, M) f32."""
    _, B, I, M = xr.shape
    O2 = wr_packed.shape[2]
    mt, n_mt, vmem_limit = _choose_mode_tile(B, I, O2, M)

    x_spec = pl.BlockSpec((pl.Squeezed(), B, I, mt), lambda m, k: (k, 0, 0, m))
    w_spec = pl.BlockSpec((pl.Squeezed(), I, O2, mt), lambda m, k: (k, 0, 0, m))
    o_spec = pl.BlockSpec((pl.Squeezed(), B, O2, mt), lambda m, k: (k, 0, 0, m))

    return pl.pallas_call(
        _spectral_kernel,
        out_shape=(jax.ShapeDtypeStruct((2, B, O2, M), jnp.float32),
                   jax.ShapeDtypeStruct((2, B, O2, M), jnp.float32)),
        grid_spec=pltpu.PrefetchScalarGridSpec(
            num_scalar_prefetch=0,
            grid=(n_mt, 2),                 # mode tiles outer, x-block (top/bot) inner
            in_specs=[x_spec, x_spec, w_spec, w_spec],
            out_specs=[o_spec, o_spec]),
        compiler_params=pltpu.CompilerParams(
            dimension_semantics=("parallel", "parallel"),   # shards across TCs on v7x
            vmem_limit_bytes=vmem_limit),
    )(xr, xi, wr_packed, wi_packed)


class SuperConv2d:
    def __init__(self, in_channels, out_channels, modes1, modes2, resolution, key,
                 weight_dtype=jnp.bfloat16):
        self.in_channels = in_channels
        self.out_channels = out_channels
        self.modes1 = modes1
        self.modes2 = modes2
        self.resolution = resolution
        scale = 1.0 / (in_channels * out_channels)
        M = modes1 * modes2

        # 4 complex weight tensors, each (Cin, Cout, modes1, modes2);
        # torch.rand(..., dtype=cfloat) draws real & imag parts uniform [0,1).
        ks = jax.random.split(key, 8)
        shape = (in_channels, out_channels, modes1, modes2)
        w_r, w_i = [], []
        for idx in range(4):
            w_r.append(scale * jax.random.uniform(ks[2 * idx], shape, dtype=jnp.float32))
            w_i.append(scale * jax.random.uniform(ks[2 * idx + 1], shape, dtype=jnp.float32))

        # f32 copies in original (w1..w4) order, for the pure-JAX reference.
        self.w_r = jnp.stack([w.reshape(in_channels, out_channels, M) for w in w_r])
        self.w_i = jnp.stack([w.reshape(in_channels, out_channels, M) for w in w_i])

        # Kernel weights: fuse the two sets that share an x block along the
        # output-channel axis and keep modes last (lane axis, no padding):
        #   block 0 (top spectral rows)    -> [w1 | w3]
        #   block 1 (bottom spectral rows) -> [w2 | w4]
        def pack(a, b):
            return jnp.concatenate([a, b], axis=1).reshape(
                in_channels, 2 * out_channels, M)

        self.wr_packed = jnp.stack(
            [pack(w_r[0], w_r[2]), pack(w_r[1], w_r[3])]).astype(weight_dtype)
        self.wi_packed = jnp.stack(
            [pack(w_i[0], w_i[2]), pack(w_i[1], w_i[3])]).astype(weight_dtype)

        # Single jit region: FFTs, slicing, Pallas call and scatter write-back
        # compile into one executable instead of separate dispatches.
        self._forward = jax.jit(self._forward_impl)

    def __call__(self, x):
        return self._forward(x, self.wr_packed, self.wi_packed)

    def _forward_impl(self, x, wr_packed, wi_packed):
        B = x.shape[0]
        m1, m2, R = self.modes1, self.modes2, self.resolution
        I, O = self.in_channels, self.out_channels
        M = m1 * m2
        Wf = R // 2 + 1

        # TODO(synk): rfft2 / irfft2 have no Pallas equivalent; kept as XLA ops.
        x_ft = jnp.fft.rfft2(x)                              # (B, I, R, Wf) complex64

        top = x_ft[:, :, :m1, :m2]
        bot = x_ft[:, :, R - m1:, :m2]
        blocks = jnp.stack([top, bot], axis=0).reshape(2, B, I, M)   # modes last
        xr = jnp.real(blocks)                                # (2, B, I, M) f32
        xi = jnp.imag(blocks)

        out_r, out_i = _spectral_complex_mul(xr, xi, wr_packed, wi_packed)
        out_c = (out_r + 1j * out_i).reshape(2, B, 2 * O, m1, m2)    # complex64

        # Write back in the original PyTorch assignment order (matters if the
        # row ranges overlap, i.e. modes1 > R // 4).
        out_ft = jnp.zeros((B, O, R, Wf), dtype=jnp.complex64)
        out_ft = out_ft.at[:, :, :m1, :m2].set(out_c[0, :, :O])                # weights1
        out_ft = out_ft.at[:, :, R - m1:, :m2].set(out_c[1, :, :O])            # weights2
        out_ft = out_ft.at[:, :, m1:2 * m1, :m2].set(out_c[0, :, O:])          # weights3
        out_ft = out_ft.at[:, :, R - 2 * m1:R - m1, :m2].set(out_c[1, :, O:])  # weights4

        return jnp.fft.irfft2(out_ft, s=(R, R))              # (B, O, R, R) float32


def _reference(x, w_r, w_i, modes1, modes2, resolution, out_channels):
    """Pure-JAX (f32/complex64) reference of the PyTorch forward."""
    B = x.shape[0]
    R, m1, m2 = resolution, modes1, modes2
    Wf = R // 2 + 1
    x_ft = jnp.fft.rfft2(x)
    w = (w_r + 1j * w_i).reshape(4, w_r.shape[1], w_r.shape[2], m1, m2)

    def mul(inp, wk):
        return jnp.einsum('bixy,ioxy->boxy', inp, wk)

    out_ft = jnp.zeros((B, out_channels, R, Wf), dtype=jnp.complex64)
    out_ft = out_ft.at[:, :, :m1, :m2].set(mul(x_ft[:, :, :m1, :m2], w[0]))
    out_ft = out_ft.at[:, :, R - m1:, :m2].set(mul(x_ft[:, :, -m1:, :m2], w[1]))
    out_ft = out_ft.at[:, :, m1:2 * m1, :m2].set(mul(x_ft[:, :, :m1, :m2], w[2]))
    out_ft = out_ft.at[:, :, R - 2 * m1:R - m1, :m2].set(mul(x_ft[:, :, -m1:, :m2], w[3]))
    return jnp.fft.irfft2(out_ft, s=(R, R))


if __name__ == "__main__":
    key = jax.random.PRNGKey(0)
    k_w, k_x = jax.random.split(key)

    B, Cin, Cout = 2, 4, 4
    modes1, modes2, resolution = 4, 4, 16

    layer = SuperConv2d(Cin, Cout, modes1, modes2, resolution, k_w)
    x = jax.random.normal(k_x, (B, Cin, resolution, resolution), dtype=jnp.float32)

    out = jax.block_until_ready(layer(x))
    assert out.shape == (B, Cout, resolution, resolution)

    ref = _reference(x, layer.w_r, layer.w_i, modes1, modes2, resolution, Cout)
    # f32 activations + bf16 weights with f32 accumulation -> compare against
    # the full-f32 reference with a relative-to-max tolerance.
    err = float(jnp.max(jnp.abs(out - ref)) / (jnp.max(jnp.abs(ref)) + 1e-12))
    assert err < 2e-2, f"mismatch vs reference: rel-max err = {err:.4e}"

    print("KERNEL_OK")
</pallas_src>

<mosaic_0001>
module attributes {stable_mosaic.version = 11 : i64} {
  func.func @_spectral_kernel(%arg0: i32, %arg1: i32, %arg2: memref<1x2x4x16xf32, #tpu.memory_space<vmem>>, %arg3: memref<1x2x4x16xf32, #tpu.memory_space<vmem>>, %arg4: memref<1x4x8x16xbf16, #tpu.memory_space<vmem>>, %arg5: memref<1x4x8x16xbf16, #tpu.memory_space<vmem>>, %arg6: memref<1x2x8x16xf32, #tpu.memory_space<vmem>>, %arg7: memref<1x2x8x16xf32, #tpu.memory_space<vmem>>) attributes {dimension_semantics = [#tpu.dimension_semantics<parallel>, #tpu.dimension_semantics<parallel>], iteration_bounds = array<i64: 1, 2>, scalar_prefetch = 0 : i64, scratch_operands = 0 : i64, tpu.core_type = #tpu.core_type<tc>, window_params = [{transform_indices = @transform_0, window_bounds = array<i64: 1, 2, 4, 16>}, {transform_indices = @transform_1, window_bounds = array<i64: 1, 2, 4, 16>}, {transform_indices = @transform_2, window_bounds = array<i64: 1, 4, 8, 16>}, {transform_indices = @transform_3, window_bounds = array<i64: 1, 4, 8, 16>}, {transform_indices = @transform_4, window_bounds = array<i64: 1, 2, 8, 16>}, {transform_indices = @transform_5, window_bounds = array<i64: 1, 2, 8, 16>}]} {
    %c0 = arith.constant 0 : index
    %c0_0 = arith.constant 0 : index
    %c0_1 = arith.constant 0 : index
    %c0_2 = arith.constant 0 : index
    %0 = vector.load %arg2[%c0, %c0_0, %c0_1, %c0_2] : memref<1x2x4x16xf32, #tpu.memory_space<vmem>>, vector<1x2x4x16xf32>
    %1 = vector.shape_cast %0 : vector<1x2x4x16xf32> to vector<2x4x16xf32>
    %c0_3 = arith.constant 0 : index
    %c0_4 = arith.constant 0 : index
    %c0_5 = arith.constant 0 : index
    %c0_6 = arith.constant 0 : index
    %2 = vector.load %arg3[%c0_3, %c0_4, %c0_5, %c0_6] : memref<1x2x4x16xf32, #tpu.memory_space<vmem>>, vector<1x2x4x16xf32>
    %3 = vector.shape_cast %2 : vector<1x2x4x16xf32> to vector<2x4x16xf32>
    %c0_7 = arith.constant 0 : index
    %c0_8 = arith.constant 0 : index
    %c0_9 = arith.constant 0 : index
    %c0_10 = arith.constant 0 : index
    %4 = vector.load %arg4[%c0_7, %c0_8, %c0_9, %c0_10] : memref<1x4x8x16xbf16, #tpu.memory_space<vmem>>, vector<1x4x8x16xbf16>
    %5 = vector.shape_cast %4 : vector<1x4x8x16xbf16> to vector<4x8x16xbf16>
    %6 = arith.extf %5 : vector<4x8x16xbf16> to vector<4x8x16xf32>
    %c0_11 = arith.constant 0 : index
    %c0_12 = arith.constant 0 : index
    %c0_13 = arith.constant 0 : index
    %c0_14 = arith.constant 0 : index
    %7 = vector.load %arg5[%c0_11, %c0_12, %c0_13, %c0_14] : memref<1x4x8x16xbf16, #tpu.memory_space<vmem>>, vector<1x4x8x16xbf16>
    %8 = vector.shape_cast %7 : vector<1x4x8x16xbf16> to vector<4x8x16xbf16>
    %9 = arith.extf %8 : vector<4x8x16xbf16> to vector<4x8x16xf32>
    %cst = arith.constant 0.000000e+00 : f32
    %10 = vector.broadcast %cst : f32 to vector<2x8x16xf32>
    %cst_15 = arith.constant 0.000000e+00 : f32
    %11 = vector.broadcast %cst_15 : f32 to vector<2x8x16xf32>
    %12 = vector.extract_strided_slice %1 {offsets = [0, 0, 0], sizes = [2, 1, 16], strides = [1, 1, 1]} : vector<2x4x16xf32> to vector<2x1x16xf32>
    %13 = vector.extract_strided_slice %3 {offsets = [0, 0, 0], sizes = [2, 1, 16], strides = [1, 1, 1]} : vector<2x4x16xf32> to vector<2x1x16xf32>
    %14 = vector.extract_strided_slice %6 {offsets = [0, 0, 0], sizes = [1, 8, 16], strides = [1, 1, 1]} : vector<4x8x16xf32> to vector<1x8x16xf32>
    %15 = vector.extract_strided_slice %9 {offsets = [0, 0, 0], sizes = [1, 8, 16], strides = [1, 1, 1]} : vector<4x8x16xf32> to vector<1x8x16xf32>
    %16 = vector.broadcast %12 : vector<2x1x16xf32> to vector<2x8x16xf32>
    %17 = vector.broadcast %14 : vector<1x8x16xf32> to vector<2x8x16xf32>
    %18 = arith.mulf %16, %17 : vector<2x8x16xf32>
    %19 = arith.addf %10, %18 : vector<2x8x16xf32>
    %20 = vector.broadcast %13 : vector<2x1x16xf32> to vector<2x8x16xf32>
    %21 = vector.broadcast %15 : vector<1x8x16xf32> to vector<2x8x16xf32>
    %22 = arith.mulf %20, %21 : vector<2x8x16xf32>
    %23 = arith.subf %19, %22 : vector<2x8x16xf32>
    %24 = vector.broadcast %12 : vector<2x1x16xf32> to vector<2x8x16xf32>
    %25 = vector.broadcast %15 : vector<1x8x16xf32> to vector<2x8x16xf32>
    %26 = arith.mulf %24, %25 : vector<2x8x16xf32>
    %27 = arith.addf %11, %26 : vector<2x8x16xf32>
    %28 = vector.broadcast %13 : vector<2x1x16xf32> to vector<2x8x16xf32>
    %29 = vector.broadcast %14 : vector<1x8x16xf32> to vector<2x8x16xf32>
    %30 = arith.mulf %28, %29 : vector<2x8x16xf32>
    %31 = arith.addf %27, %30 : vector<2x8x16xf32>
    %32 = vector.extract_strided_slice %1 {offsets = [0, 1, 0], sizes = [2, 1, 16], strides = [1, 1, 1]} : vector<2x4x16xf32> to vector<2x1x16xf32>
    %33 = vector.extract_strided_slice %3 {offsets = [0, 1, 0], sizes = [2, 1, 16], strides = [1, 1, 1]} : vector<2x4x16xf32> to vector<2x1x16xf32>
    %34 = vector.extract_strided_slice %6 {offsets = [1, 0, 0], sizes = [1, 8, 16], strides = [1, 1, 1]} : vector<4x8x16xf32> to vector<1x8x16xf32>
    %35 = vector.extract_strided_slice %9 {offsets = [1, 0, 0], sizes = [1, 8, 16], strides = [1, 1, 1]} : vector<4x8x16xf32> to vector<1x8x16xf32>
    %36 = vector.broadcast %32 : vector<2x1x16xf32> to vector<2x8x16xf32>
    %37 = vector.broadcast %34 : vector<1x8x16xf32> to vector<2x8x16xf32>
    %38 = arith.mulf %36, %37 : vector<2x8x16xf32>
    %39 = arith.addf %23, %38 : vector<2x8x16xf32>
    %40 = vector.broadcast %33 : vector<2x1x16xf32> to vector<2x8x16xf32>
    %41 = vector.broadcast %35 : vector<1x8x16xf32> to vector<2x8x16xf32>
    %42 = arith.mulf %40, %41 : vector<2x8x16xf32>
    %43 = arith.subf %39, %42 : vector<2x8x16xf32>
    %44 = vector.broadcast %32 : vector<2x1x16xf32> to vector<2x8x16xf32>
    %45 = vector.broadcast %35 : vector<1x8x16xf32> to vector<2x8x16xf32>
    %46 = arith.mulf %44, %45 : vector<2x8x16xf32>
    %47 = arith.addf %31, %46 : vector<2x8x16xf32>
    %48 = vector.broadcast %33 : vector<2x1x16xf32> to vector<2x8x16xf32>
    %49 = vector.broadcast %34 : vector<1x8x16xf32> to vector<2x8x16xf32>
    %50 = arith.mulf %48, %49 : vector<2x8x16xf32>
    %51 = arith.addf %47, %50 : vector<2x8x16xf32>
    %52 = vector.extract_strided_slice %1 {offsets = [0, 2, 0], sizes = [2, 1, 16], strides = [1, 1, 1]} : vector<2x4x16xf32> to vector<2x1x16xf32>
    %53 = vector.extract_strided_slice %3 {offsets = [0, 2, 0], sizes = [2, 1, 16], strides = [1, 1, 1]} : vector<2x4x16xf32> to vector<2x1x16xf32>
    %54 = vector.extract_strided_slice %6 {offsets = [2, 0, 0], sizes = [1, 8, 16], strides = [1, 1, 1]} : vector<4x8x16xf32> to vector<1x8x16xf32>
    %55 = vector.extract_strided_slice %9 {offsets = [2, 0, 0], sizes = [1, 8, 16], strides = [1, 1, 1]} : vector<4x8x16xf32> to vector<1x8x16xf32>
    %56 = vector.broadcast %52 : vector<2x1x16xf32> to vector<2x8x16xf32>
    %57 = vector.broadcast %54 : vector<1x8x16xf32> to vector<2x8x16xf32>
    %58 = arith.mulf %56, %57 : vector<2x8x16xf32>
    %59 = arith.addf %43, %58 : vector<2x8x16xf32>
    %60 = vector.broadcast %53 : vector<2x1x16xf32> to vector<2x8x16xf32>
    %61 = vector.broadcast %55 : vector<1x8x16xf32> to vector<2x8x16xf32>
    %62 = arith.mulf %60, %61 : vector<2x8x16xf32>
    %63 = arith.subf %59, %62 : vector<2x8x16xf32>
    %64 = vector.broadcast %52 : vector<2x1x16xf32> to vector<2x8x16xf32>
    %65 = vector.broadcast %55 : vector<1x8x16xf32> to vector<2x8x16xf32>
    %66 = arith.mulf %64, %65 : vector<2x8x16xf32>
    %67 = arith.addf %51, %66 : vector<2x8x16xf32>
    %68 = vector.broadcast %53 : vector<2x1x16xf32> to vector<2x8x16xf32>
    %69 = vector.broadcast %54 : vector<1x8x16xf32> to vector<2x8x16xf32>
    %70 = arith.mulf %68, %69 : vector<2x8x16xf32>
    %71 = arith.addf %67, %70 : vector<2x8x16xf32>
    %72 = vector.extract_strided_slice %1 {offsets = [0, 3, 0], sizes = [2, 1, 16], strides = [1, 1, 1]} : vector<2x4x16xf32> to vector<2x1x16xf32>
    %73 = vector.extract_strided_slice %3 {offsets = [0, 3, 0], sizes = [2, 1, 16], strides = [1, 1, 1]} : vector<2x4x16xf32> to vector<2x1x16xf32>
    %74 = vector.extract_strided_slice %6 {offsets = [3, 0, 0], sizes = [1, 8, 16], strides = [1, 1, 1]} : vector<4x8x16xf32> to vector<1x8x16xf32>
    %75 = vector.extract_strided_slice %9 {offsets = [3, 0, 0], sizes = [1, 8, 16], strides = [1, 1, 1]} : vector<4x8x16xf32> to vector<1x8x16xf32>
    %76 = vector.broadcast %72 : vector<2x1x16xf32> to vector<2x8x16xf32>
    %77 = vector.broadcast %74 : vector<1x8x16xf32> to vector<2x8x16xf32>
    %78 = arith.mulf %76, %77 : vector<2x8x16xf32>
    %79 = arith.addf %63, %78 : vector<2x8x16xf32>
    %80 = vector.broadcast %73 : vector<2x1x16xf32> to vector<2x8x16xf32>
    %81 = vector.broadcast %75 : vector<1x8x16xf32> to vector<2x8x16xf32>
    %82 = arith.mulf %80, %81 : vector<2x8x16xf32>
    %83 = arith.subf %79, %82 : vector<2x8x16xf32>
    %84 = vector.broadcast %72 : vector<2x1x16xf32> to vector<2x8x16xf32>
    %85 = vector.broadcast %75 : vector<1x8x16xf32> to vector<2x8x16xf32>
    %86 = arith.mulf %84, %85 : vector<2x8x16xf32>
    %87 = arith.addf %71, %86 : vector<2x8x16xf32>
    %88 = vector.broadcast %73 : vector<2x1x16xf32> to vector<2x8x16xf32>
    %89 = vector.broadcast %74 : vector<1x8x16xf32> to vector<2x8x16xf32>
    %90 = arith.mulf %88, %89 : vector<2x8x16xf32>
    %91 = arith.addf %87, %90 : vector<2x8x16xf32>
    %c0_16 = arith.constant 0 : index
    %c0_17 = arith.constant 0 : index
    %c0_18 = arith.constant 0 : index
    %c0_19 = arith.constant 0 : index
    %92 = vector.load %arg6[%c0_16, %c0_17, %c0_18, %c0_19] : memref<1x2x8x16xf32, #tpu.memory_space<vmem>>, vector<1x2x8x16xf32>
    %93 = vector.shape_cast %92 : vector<1x2x8x16xf32> to vector<2x8x16xf32>
    %94 = vector.shape_cast %83 : vector<2x8x16xf32> to vector<1x2x8x16xf32>
    tpu.vector_store %arg6[%c0_16, %c0_17, %c0_18, %c0_19], %94 {strides = array<i32>} : memref<1x2x8x16xf32, #tpu.memory_space<vmem>>, vector<1x2x8x16xf32>,
    %c0_20 = arith.constant 0 : index
    %c0_21 = arith.constant 0 : index
    %c0_22 = arith.constant 0 : index
    %c0_23 = arith.constant 0 : index
    %95 = vector.load %arg7[%c0_20, %c0_21, %c0_22, %c0_23] : memref<1x2x8x16xf32, #tpu.memory_space<vmem>>, vector<1x2x8x16xf32>
    %96 = vector.shape_cast %95 : vector<1x2x8x16xf32> to vector<2x8x16xf32>
    %97 = vector.shape_cast %91 : vector<2x8x16xf32> to vector<1x2x8x16xf32>
    tpu.vector_store %arg7[%c0_20, %c0_21, %c0_22, %c0_23], %97 {strides = array<i32>} : memref<1x2x8x16xf32, #tpu.memory_space<vmem>>, vector<1x2x8x16xf32>,
    return
  }
  func.func @transform_0(%arg0: i32, %arg1: i32) -> (i32, i32, i32, i32) {
    %c0_i32 = arith.constant 0 : i32
    %c0_i32_0 = arith.constant 0 : i32
    %c0_i32_1 = arith.constant 0 : i32
    return %arg1, %c0_i32, %c0_i32_0, %arg0 : i32, i32, i32, i32
  }
  func.func @transform_1(%arg0: i32, %arg1: i32) -> (i32, i32, i32, i32) {
    %c0_i32 = arith.constant 0 : i32
    %c0_i32_0 = arith.constant 0 : i32
    %c0_i32_1 = arith.constant 0 : i32
    return %arg1, %c0_i32, %c0_i32_0, %arg0 : i32, i32, i32, i32
  }
  func.func @transform_2(%arg0: i32, %arg1: i32) -> (i32, i32, i32, i32) {
    %c0_i32 = arith.constant 0 : i32
    %c0_i32_0 = arith.constant 0 : i32
    %c0_i32_1 = arith.constant 0 : i32
    return %arg1, %c0_i32, %c0_i32_0, %arg0 : i32, i32, i32, i32
  }
  func.func @transform_3(%arg0: i32, %arg1: i32) -> (i32, i32, i32, i32) {
    %c0_i32 = arith.constant 0 : i32
    %c0_i32_0 = arith.constant 0 : i32
    %c0_i32_1 = arith.constant 0 : i32
    return %arg1, %c0_i32, %c0_i32_0, %arg0 : i32, i32, i32, i32
  }
  func.func @transform_4(%arg0: i32, %arg1: i32) -> (i32, i32, i32, i32) {
    %c0_i32 = arith.constant 0 : i32
    %c0_i32_0 = arith.constant 0 : i32
    %c0_i32_1 = arith.constant 0 : i32
    return %arg1, %c0_i32, %c0_i32_0, %arg0 : i32, i32, i32, i32
  }
  func.func @transform_5(%arg0: i32, %arg1: i32) -> (i32, i32, i32, i32) {
    %c0_i32 = arith.constant 0 : i32
    %c0_i32_0 = arith.constant 0 : i32
    %c0_i32_1 = arith.constant 0 : i32
    return %arg1, %c0_i32, %c0_i32_0, %arg0 : i32, i32, i32, i32
  }
}

</mosaic_0001>

<llo_original>
// kernel: _forward_impl.1
$region0: #{_forward_impl.1}
  #allocation0 [shape = 'u32[]', space=smem, size = 0x4, offset = 0x4, fixed_abs, tag = 'smem constant byte address 0x4 - core index']
  #allocation1 [shape = 'u32[72,128]{1,0:T(1,128)}', space=vmem, size = 0x9000, scoped, tag = 'internal scratch']
  %s0 = inlined_call_operand.vmem [shape: f32[2,2,4,16], index: 0, kind: input, shape index: {}]
  %s1 = inlined_call_operand.vmem [shape: f32[2,2,4,16], index: 1, kind: input, shape index: {}]
  %s2 = inlined_call_operand.vmem [shape: bf16[2,4,8,16], index: 2, kind: input, shape index: {}]
  %s3 = inlined_call_operand.vmem [shape: bf16[2,4,8,16], index: 3, kind: input, shape index: {}]
  %s4 = inlined_call_operand.vmem [shape: f32[2,2,8,16], index: 4, kind: output, shape index: {0}]
  %s5 = inlined_call_operand.vmem [shape: f32[2,2,8,16], index: 5, kind: output, shape index: {1}]
  %6 = xla_tuple %s4, %s5
  %s7 = sld [smem:[#allocation0]]
  $region57: #{_forward_impl.1} parent=0
    _
  %s9 = ssub.s32 1, %s7
  %s10 = scalar_select 0, %s9, %s7
  loop: start=0, step=1, limit=4
  $region2: #{_forward_impl.1} parent=0 // loop_pre_header
    _
  $region3: #{_forward_impl.1} parent=0 // loop_header
    %s12 = sphi 0, %s16
    %p13 = scmp.ge.s32.totalorder %s12, 4
    %s19 = sphi 0, %s31
    %s20 = sphi 0, %s27
    %s21 = sphi 0, %s19
    %s22 = sphi 0, %s20
    %s23 = sphi 0, %s21
    %s24 = sphi 0, %s22
    %s36 = sphi 0, %s38
    %s39 = sphi 0, %s36
    %s40 = sphi 0, %s39
    %s56 = sphi 0, %s40
    %s64 = sphi 0, %s66
    %s67 = sphi 0, %s64
    %s68 = sphi 0, %s67
    %s84 = sphi 0, %s68
    %s92 = sphi 0, %s94
    %s95 = sphi 0, %s92
    %s96 = sphi 0, %s95
    %s112 = sphi 0, %s96
    %s120 = sphi 0, %s122
    %s123 = sphi 0, %s120
    %s124 = sphi 0, %s123
    %s140 = sphi 0, %s124
    %s148 = sphi 0, %s150
    %s151 = sphi 0, %s148
    %s152 = sphi 0, %s151
    %s168 = sphi 0, %s152
    %s176 = sphi 0, %s178
    %s179 = sphi 0, %s176
    %s180 = sphi 0, %s179
    %s196 = sphi 0, %s180
  $region4: #{_forward_impl.1} parent=0 // loop_header_branch
    %15 = sbr.rel (%p13) target = $region8
  $region5: #{_forward_impl.1} parent=0 // loop_body
    %s17 = ssub.s32 %s12, 1
    %s18 = ssub.s32 %s12, 2
    %s25 = sadd.s32 1, %s20
    %p26 = scmp.ge.s32.totalorder %s25, 2
    %s27 = scalar_select %p26, 0, %s25
    %s28 = sadd.s32 1, %s19
    %s29 = scalar_select %p26, %s28, %s19
    %p30 = scmp.ge.s32.totalorder %s29, 1
    %s31 = scalar_select %p30, 0, %s29
    %s32 = ssub.s32 %s20, %s27
    %s33 = ssub.s32 %s19, %s31
    %s34 = sor.u32 %s32, %s33
    %p35 = scmp.eq.s32.totalorder %s34, 0
    %s37 = sadd.s32 %s36, 1
    %s38 = scalar_select %p35, %s36, %s37
    %p41 = pneg %p35
    %p42 = scmp.eq.s32.totalorder %s12, 1
    %p43 = por %p41, %p42
    %p44 = scmp.ne.s32.totalorder %s36, %s39
    %p45 = scmp.eq.s32.totalorder %s12, 0
    %p46 = por %p44, %p45
    %p47 = scmp.ne.s32.totalorder %s36, %s39
    %p48 = scmp.eq.s32.totalorder %s17, 1
    %p49 = por %p47, %p48
    %p50 = scmp.ne.s32.totalorder %s39, %s40
    %p51 = scmp.eq.s32.totalorder %s17, 0
    %p52 = por %p50, %p51
    %p53 = scmp.ne.s32.totalorder %s39, %s40
    %p54 = scmp.eq.s32.totalorder %s18, 1
    %p55 = por %p53, %p54
    %p57 = scmp.ne.s32.totalorder %s40, %s56
    %p58 = scmp.eq.s32.totalorder %s18, 0
    %p59 = por %p57, %p58
    %s60 = ssub.s32 %s20, %s27
    %s61 = ssub.s32 %s19, %s31
    %s62 = sor.u32 %s60, %s61
    %p63 = scmp.eq.s32.totalorder %s62, 0
    %s65 = sadd.s32 %s64, 1
    %s66 = scalar_select %p63, %s64, %s65
    %p69 = pneg %p63
    %p70 = scmp.eq.s32.totalorder %s12, 1
    %p71 = por %p69, %p70
    %p72 = scmp.ne.s32.totalorder %s64, %s67
    %p73 = scmp.eq.s32.totalorder %s12, 0
    %p74 = por %p72, %p73
    %p75 = scmp.ne.s32.totalorder %s64, %s67
    %p76 = scmp.eq.s32.totalorder %s17, 1
    %p77 = por %p75, %p76
    %p78 = scmp.ne.s32.totalorder %s67, %s68
    %p79 = scmp.eq.s32.totalorder %s17, 0
    %p80 = por %p78, %p79
    %p81 = scmp.ne.s32.totalorder %s67, %s68
    %p82 = scmp.eq.s32.totalorder %s18, 1
    %p83 = por %p81, %p82
    %p85 = scmp.ne.s32.totalorder %s68, %s84
    %p86 = scmp.eq.s32.totalorder %s18, 0
    %p87 = por %p85, %p86
    %s88 = ssub.s32 %s20, %s27
    %s89 = ssub.s32 %s19, %s31
    %s90 = sor.u32 %s88, %s89
    %p91 = scmp.eq.s32.totalorder %s90, 0
    %s93 = sadd.s32 %s92, 1
    %s94 = scalar_select %p91, %s92, %s93
    %p97 = pneg %p91
    %p98 = scmp.eq.s32.totalorder %s12, 1
    %p99 = por %p97, %p98
    %p100 = scmp.ne.s32.totalorder %s92, %s95
    %p101 = scmp.eq.s32.totalorder %s12, 0
    %p102 = por %p100, %p101
    %p103 = scmp.ne.s32.totalorder %s92, %s95
    %p104 = scmp.eq.s32.totalorder %s17, 1
    %p105 = por %p103, %p104
    %p106 = scmp.ne.s32.totalorder %s95, %s96
    %p107 = scmp.eq.s32.totalorder %s17, 0
    %p108 = por %p106, %p107
    %p109 = scmp.ne.s32.totalorder %s95, %s96
    %p110 = scmp.eq.s32.totalorder %s18, 1
    %p111 = por %p109, %p110
    %p113 = scmp.ne.s32.totalorder %s96, %s112
    %p114 = scmp.eq.s32.totalorder %s18, 0
    %p115 = por %p113, %p114
    %s116 = ssub.s32 %s20, %s27
    %s117 = ssub.s32 %s19, %s31
    %s118 = sor.u32 %s116, %s117
    %p119 = scmp.eq.s32.totalorder %s118, 0
    %s121 = sadd.s32 %s120, 1
    %s122 = scalar_select %p119, %s120, %s121
    %p125 = pneg %p119
    %p126 = scmp.eq.s32.totalorder %s12, 1
    %p127 = por %p125, %p126
    %p128 = scmp.ne.s32.totalorder %s120, %s123
    %p129 = scmp.eq.s32.totalorder %s12, 0
    %p130 = por %p128, %p129
    %p131 = scmp.ne.s32.totalorder %s120, %s123
    %p132 = scmp.eq.s32.totalorder %s17, 1
    %p133 = por %p131, %p132
    %p134 = scmp.ne.s32.totalorder %s123, %s124
    %p135 = scmp.eq.s32.totalorder %s17, 0
    %p136 = por %p134, %p135
    %p137 = scmp.ne.s32.totalorder %s123, %s124
    %p138 = scmp.eq.s32.totalorder %s18, 1
    %p139 = por %p137, %p138
    %p141 = scmp.ne.s32.totalorder %s124, %s140
    %p142 = scmp.eq.s32.totalorder %s18, 0
    %p143 = por %p141, %p142
    %s144 = ssub.s32 %s20, %s27
    %s145 = ssub.s32 %s19, %s31
    %s146 = sor.u32 %s144, %s145
    %p147 = scmp.eq.s32.totalorder %s146, 0
    %s149 = sadd.s32 %s148, 1
    %s150 = scalar_select %p147, %s148, %s149
    %p153 = pneg %p147
    %p154 = scmp.eq.s32.totalorder %s12, 1
    %p155 = por %p153, %p154
    %p156 = scmp.ne.s32.totalorder %s148, %s151
    %p157 = scmp.eq.s32.totalorder %s12, 0
    %p158 = por %p156, %p157
    %p159 = scmp.ne.s32.totalorder %s148, %s151
    %p160 = scmp.eq.s32.totalorder %s17, 1
    %p161 = por %p159, %p160
    %p162 = scmp.ne.s32.totalorder %s151, %s152
    %p163 = scmp.eq.s32.totalorder %s17, 0
    %p164 = por %p162, %p163
    %p165 = scmp.ne.s32.totalorder %s151, %s152
    %p166 = scmp.eq.s32.totalorder %s18, 1
    %p167 = por %p165, %p166
    %p169 = scmp.ne.s32.totalorder %s152, %s168
    %p170 = scmp.eq.s32.totalorder %s18, 0
    %p171 = por %p169, %p170
    %s172 = ssub.s32 %s20, %s27
    %s173 = ssub.s32 %s19, %s31
    %s174 = sor.u32 %s172, %s173
    %p175 = scmp.eq.s32.totalorder %s174, 0
    %s177 = sadd.s32 %s176, 1
    %s178 = scalar_select %p175, %s176, %s177
    %p181 = pneg %p175
    %p182 = scmp.eq.s32.totalorder %s12, 1
    %p183 = por %p181, %p182
    %p184 = scmp.ne.s32.totalorder %s176, %s179
    %p185 = scmp.eq.s32.totalorder %s12, 0
    %p186 = por %p184, %p185
    %p187 = scmp.ne.s32.totalorder %s176, %s179
    %p188 = scmp.eq.s32.totalorder %s17, 1
    %p189 = por %p187, %p188
    %p190 = scmp.ne.s32.totalorder %s179, %s180
    %p191 = scmp.eq.s32.totalorder %s17, 0
    %p192 = por %p190, %p191
    %p193 = scmp.ne.s32.totalorder %s179, %s180
    %p194 = scmp.eq.s32.totalorder %s18, 1
    %p195 = por %p193, %p194
    %p197 = scmp.ne.s32.totalorder %s180, %s196
    %p198 = scmp.eq.s32.totalorder %s18, 0
    %p199 = por %p197, %p198
    %p200 = scmp.le.s32.totalorder 1, %s12
    %p201 = scmp.lt.s32.totalorder %s12, 3
    %p202 = pnand %p200, %p201
    %p203 = pneg %p202
    // Predicated region
    $region9: #{_forward_impl.1} parent=5 // pred_check
      _
    $region10: #{_forward_impl.1} parent=5 // pred_check_branch
      %205 = sbr.rel (%p202) target = $region12
    $region11: #{_forward_impl.1} parent=5 // pred_region
      %s206 = ssub.s32 %s12, 1
    $region12: #{_forward_impl.1} parent=5 // pred_fallthru
      _
    %p207 = scmp.lt.s32.totalorder %s12, 2
    // Predicated region
    $region13: #{_forward_impl.1} parent=5 // pred_check
      %p208 = pneg %p207
    $region14: #{_forward_impl.1} parent=5 // pred_check_branch
      %210 = sbr.rel (%p208) target = $region16
    $region15: #{_forward_impl.1} parent=5 // pred_region
      // Predicated region
      $region17: #{_forward_impl.1} parent=15 // pred_check
        %p211 = pneg %p46
      $region18: #{_forward_impl.1} parent=15 // pred_check_branch
        %213 = sbr.rel (%p211) target = $region20
      $region19: #{_forward_impl.1} parent=15 // pred_region
        %p214 = scmp.lt.s32.totalorder %s20, 1
        %s215 = scalar_select %p214, %s20, 1
        %p216 = scmp.lt.s32.totalorder %s19, 0
        %s217 = scalar_select %p216, %s19, 0
        %s218 = smul.addr %s215, 2
        %s219 = sadd.s32 %s217, %s218
        %s220 = smul.addr %s219, 4
        %s221 = scalar_lea.vmem %s0, %s220
      $region20: #{_forward_impl.1} parent=15 // pred_fallthru
        _
      // Predicated region
      $region21: #{_forward_impl.1} parent=15 // pred_check
        %p222 = pneg %p74
      $region22: #{_forward_impl.1} parent=15 // pred_check_branch
        %224 = sbr.rel (%p222) target = $region24
      $region23: #{_forward_impl.1} parent=15 // pred_region
        %p225 = scmp.lt.s32.totalorder %s20, 1
        %s226 = scalar_select %p225, %s20, 1
        %p227 = scmp.lt.s32.totalorder %s19, 0
        %s228 = scalar_select %p227, %s19, 0
        %s229 = smul.addr %s226, 2
        %s230 = sadd.s32 %s228, %s229
        %s231 = smul.addr %s230, 4
        %s232 = scalar_lea.vmem %s1, %s231
      $region24: #{_forward_impl.1} parent=15 // pred_fallthru
        _
      // Predicated region
      $region25: #{_forward_impl.1} parent=15 // pred_check
        %p233 = pneg %p102
      $region26: #{_forward_impl.1} parent=15 // pred_check_branch
        %235 = sbr.rel (%p233) target = $region28
      $region27: #{_forward_impl.1} parent=15 // pred_region
        %p236 = scmp.lt.s32.totalorder %s20, 1
        %s237 = scalar_select %p236, %s20, 1
        %p238 = scmp.lt.s32.totalorder %s19, 0
        %s239 = scalar_select %p238, %s19, 0
        %s240 = smul.addr %s237, 4
        %s241 = sadd.s32 %s239, %s240
        %s242 = smul.addr %s241, 4
        %s243 = scalar_lea.vmem %s2, %s242
      $region28: #{_forward_impl.1} parent=15 // pred_fallthru
        _
      // Predicated region
      $region29: #{_forward_impl.1} parent=15 // pred_check
        %p244 = pneg %p130
      $region30: #{_forward_impl.1} parent=15 // pred_check_branch
        %246 = sbr.rel (%p244) target = $region32
      $region31: #{_forward_impl.1} parent=15 // pred_region
        %p247 = scmp.lt.s32.totalorder %s20, 1
        %s248 = scalar_select %p247, %s20, 1
        %p249 = scmp.lt.s32.totalorder %s19, 0
        %s250 = scalar_select %p249, %s19, 0
        %s251 = smul.addr %s248, 4
        %s252 = sadd.s32 %s250, %s251
        %s253 = smul.addr %s252, 4
        %s254 = scalar_lea.vmem %s3, %s253
      $region32: #{_forward_impl.1} parent=15 // pred_fallthru
        _
    $region16: #{_forward_impl.1} parent=5 // pred_fallthru
      _
    %p255 = scmp.le.s32.totalorder 1, %s12
    %p256 = scmp.lt.s32.totalorder %s12, 3
    %p257 = pnand %p255, %p256
    %p258 = pneg %p257
    // Predicated region
    $region33: #{_forward_impl.1} parent=5 // pred_check
      _
    $region34: #{_forward_impl.1} parent=5 // pred_check_branch
      %260 = sbr.rel (%p257) target = $region36
    $region35: #{_forward_impl.1} parent=5 // pred_region
      %s261 = ssub.s32 %s12, 1
      %p262 = scmp.lt.s32.totalorder %s22, 1
      %s263 = scalar_select %p262, %s22, 1
      %p264 = scmp.lt.s32.totalorder %s21, 0
      %s265 = scalar_select %p264, %s21, 0
      %s266 = smul.addr %s263, 2
      %s267 = sadd.s32 %s265, %s266
      %s268 = smul.addr %s267, 4
      %s269 = scalar_lea.vmem %s0, %s268
      %p270 = pneg %p52
      %p271 = pneg %p49
      %p272 = scmp.lt.s32.totalorder %s22, 1
      %s273 = scalar_select %p272, %s22, 1
      %p274 = scmp.lt.s32.totalorder %s21, 0
      %s275 = scalar_select %p274, %s21, 0
      %s276 = smul.addr %s273, 2
      %s277 = sadd.s32 %s275, %s276
      %s278 = smul.addr %s277, 4
      %s279 = scalar_lea.vmem %s1, %s278
      %p280 = pneg %p80
      %p281 = pneg %p77
      %p282 = scmp.lt.s32.totalorder %s22, 1
      %s283 = scalar_select %p282, %s22, 1
      %p284 = scmp.lt.s32.totalorder %s21, 0
      %s285 = scalar_select %p284, %s21, 0
      %s286 = smul.addr %s283, 4
      %s287 = sadd.s32 %s285, %s286
      %s288 = smul.addr %s287, 4
      %s289 = scalar_lea.vmem %s2, %s288
      %p290 = pneg %p108
      %p291 = pneg %p105
      %p292 = scmp.lt.s32.totalorder %s22, 1
      %s293 = scalar_select %p292, %s22, 1
      %p294 = scmp.lt.s32.totalorder %s21, 0
      %s295 = scalar_select %p294, %s21, 0
      %s296 = smul.addr %s293, 4
      %s297 = sadd.s32 %s295, %s296
      %s298 = smul.addr %s297, 4
      %s299 = scalar_lea.vmem %s3, %s298
      %p300 = pneg %p136
      %p301 = pneg %p133
      %p302 = pneg %p164
      %p303 = pneg %p161
      %p304 = scmp.lt.s32.totalorder %s22, 1
      %s305 = scalar_select %p304, %s22, 1
      %p306 = scmp.lt.s32.totalorder %s21, 0
      %s307 = scalar_select %p306, %s21, 0
      %s308 = smul.addr %s305, 2
      %s309 = sadd.s32 %s307, %s308
      %s310 = smul.addr %s309, 8
      %s311 = scalar_lea.vmem %s4, %s310
      %p312 = pneg %p192
      %p313 = pneg %p189
      %p314 = scmp.lt.s32.totalorder %s22, 1
      %s315 = scalar_select %p314, %s22, 1
      %p316 = scmp.lt.s32.totalorder %s21, 0
      %s317 = scalar_select %p316, %s21, 0
      %s318 = smul.addr %s315, 2
      %s319 = sadd.s32 %s317, %s318
      %s320 = smul.addr %s319, 8
      %s321 = scalar_lea.vmem %s5, %s320
      %p322 = scmp.lt.s32.totalorder %s22, 1
      %s323 = scalar_select %p322, %s22, 1
      %p324 = scmp.lt.s32.totalorder %s21, 0
      %s325 = scalar_select %p324, %s21, 0
      %s326 = smul.addr %s323, 2
      %s327 = sadd.s32 %s325, %s326
      %s328 = smul.addr %s327, 4
      %s329 = scalar_lea.vmem %s0, %s328
      %p330 = scmp.lt.s32.totalorder %s22, 1
      %s331 = scalar_select %p330, %s22, 1
      %p332 = scmp.lt.s32.totalorder %s21, 0
      %s333 = scalar_select %p332, %s21, 0
      %s334 = smul.addr %s331, 2
      %s335 = sadd.s32 %s333, %s334
      %s336 = smul.addr %s335, 4
      %s337 = scalar_lea.vmem %s1, %s336
      %p338 = scmp.lt.s32.totalorder %s22, 1
      %s339 = scalar_select %p338, %s22, 1
      %p340 = scmp.lt.s32.totalorder %s21, 0
      %s341 = scalar_select %p340, %s21, 0
      %s342 = smul.addr %s339, 4
      %s343 = sadd.s32 %s341, %s342
      %s344 = smul.addr %s343, 4
      %s345 = scalar_lea.vmem %s2, %s344
      %p346 = scmp.lt.s32.totalorder %s22, 1
      %s347 = scalar_select %p346, %s22, 1
      %p348 = scmp.lt.s32.totalorder %s21, 0
      %s349 = scalar_select %p348, %s21, 0
      %s350 = smul.addr %s347, 4
      %s351 = sadd.s32 %s349, %s350
      %s352 = smul.addr %s351, 4
      %s353 = scalar_lea.vmem %s3, %s352
      %p354 = scmp.lt.s32.totalorder %s22, 1
      %s355 = scalar_select %p354, %s22, 1
      %p356 = scmp.lt.s32.totalorder %s21, 0
      %s357 = scalar_select %p356, %s21, 0
      %s358 = smul.addr %s355, 2
      %s359 = sadd.s32 %s357, %s358
      %s360 = smul.addr %s359, 8
      %s361 = scalar_lea.vmem %s4, %s360
      %p362 = scmp.lt.s32.totalorder %s22, 1
      %s363 = scalar_select %p362, %s22, 1
      %p364 = scmp.lt.s32.totalorder %s21, 0
      %s365 = scalar_select %p364, %s21, 0
      %s366 = smul.addr %s363, 2
      %s367 = sadd.s32 %s365, %s366
      %s368 = smul.addr %s367, 8
      %s369 = scalar_lea.vmem %s5, %s368
      %v370 = vld [vmem:[%s329] sm:$0xf]
      %v371 = vld [vmem:[%s329 + $0x4] sm:$0xf]
      %v372 = vld [vmem:[%s337] sm:$0xf]
      %v373 = vld [vmem:[%s337 + $0x4] sm:$0xf]
      %v374 = vld [vmem:[%s345] sm:$0xf]
      %v375 = vld [vmem:[%s345 + $0x4] sm:$0xf]
      %v376 = vld [vmem:[%s345 + $0x8] sm:$0xf]
      %v377 = vld [vmem:[%s345 + $0xc] sm:$0xf]
      %v378 = vunpack.c.l.bf16 %v374
      %v379 = vunpack.c.l.bf16 %v375
      %v380 = vunpack.c.l.bf16 %v376
      %v381 = vunpack.c.l.bf16 %v377
      %v382 = vld [vmem:[%s353] sm:$0xf]
      %v383 = vld [vmem:[%s353 + $0x4] sm:$0xf]
      %v384 = vld [vmem:[%s353 + $0x8] sm:$0xf]
      %v385 = vld [vmem:[%s353 + $0xc] sm:$0xf]
      %v386 = vunpack.c.l.bf16 %v382
      %v387 = vunpack.c.l.bf16 %v383
      %v388 = vunpack.c.l.bf16 %v384
      %v389 = vunpack.c.l.bf16 %v385
      %v390 = vperm.slane %v370, 0
      %v391 = vperm.slane %v371, 0
      %v392 = vmul.f32 %v390, %v378
      %v393 = vmul.f32 %v391, %v378
      %v394 = vadd.f32 %v392, 0.0
      %v395 = vadd.f32 %v393, 0.0
      %v396 = vperm.slane %v372, 0
      %v397 = vperm.slane %v373, 0
      %v398 = vmul.f32 %v396, %v386
      %v399 = vmul.f32 %v397, %v386
      %v400 = vsub.f32 %v394, %v398
      %v401 = vsub.f32 %v395, %v399
      %v402 = vmul.f32 %v390, %v386
      %v403 = vmul.f32 %v391, %v386
      %v404 = vadd.f32 %v402, 0.0
      %v405 = vadd.f32 %v403, 0.0
      %v406 = vmul.f32 %v396, %v378
      %v407 = vmul.f32 %v397, %v378
      %v408 = vadd.f32 %v404, %v406
      %v409 = vadd.f32 %v405, %v407
      %v410 = vperm.slane %v370, 1
      %v411 = vperm.slane %v371, 1
      %v412 = vmul.f32 %v410, %v379
      %v413 = vmul.f32 %v411, %v379
      %v414 = vadd.f32 %v400, %v412
      %v415 = vadd.f32 %v401, %v413
      %v416 = vperm.slane %v372, 1
      %v417 = vperm.slane %v373, 1
      %v418 = vmul.f32 %v416, %v387
      %v419 = vmul.f32 %v417, %v387
      %v420 = vsub.f32 %v414, %v418
      %v421 = vsub.f32 %v415, %v419
      %v422 = vmul.f32 %v410, %v387
      %v423 = vmul.f32 %v411, %v387
      %v424 = vadd.f32 %v408, %v422
      %v425 = vadd.f32 %v409, %v423
      %v426 = vmul.f32 %v416, %v379
      %v427 = vmul.f32 %v417, %v379
      %v428 = vadd.f32 %v424, %v426
      %v429 = vadd.f32 %v425, %v427
      %v430 = vperm.slane %v370, 2
      %v431 = vperm.slane %v371, 2
      %v432 = vmul.f32 %v430, %v380
      %v433 = vmul.f32 %v431, %v380
      %v434 = vadd.f32 %v420, %v432
      %v435 = vadd.f32 %v421, %v433
      %v436 = vperm.slane %v372, 2
      %v437 = vperm.slane %v373, 2
      %v438 = vmul.f32 %v436, %v388
      %v439 = vmul.f32 %v437, %v388
      %v440 = vsub.f32 %v434, %v438
      %v441 = vsub.f32 %v435, %v439
      %v442 = vmul.f32 %v430, %v388
      %v443 = vmul.f32 %v431, %v388
      %v444 = vadd.f32 %v428, %v442
      %v445 = vadd.f32 %v429, %v443
      %v446 = vmul.f32 %v436, %v380
      %v447 = vmul.f32 %v437, %v380
      %v448 = vadd.f32 %v444, %v446
      %v449 = vadd.f32 %v445, %v447
      %v450 = vperm.slane %v370, 3
      %v451 = vperm.slane %v371, 3
      %v452 = vmul.f32 %v450, %v381
      %v453 = vmul.f32 %v451, %v381
      %v454 = vadd.f32 %v440, %v452
      %v455 = vadd.f32 %v441, %v453
      %v456 = vperm.slane %v372, 3
      %v457 = vperm.slane %v373, 3
      %v458 = vmul.f32 %v456, %v389
      %v459 = vmul.f32 %v457, %v389
      %v460 = vsub.f32 %v454, %v458
      %v461 = vsub.f32 %v455, %v459
      %v462 = vmul.f32 %v450, %v389
      %v463 = vmul.f32 %v451, %v389
      %v464 = vadd.f32 %v448, %v462
      %v465 = vadd.f32 %v449, %v463
      %v466 = vmul.f32 %v456, %v381
      %v467 = vmul.f32 %v457, %v381
      %v468 = vadd.f32 %v464, %v466
      %v469 = vadd.f32 %v465, %v467
      %vm470 = vcmask 130048
      %471 = vst.msk [vmem:[%s361] sm:$0xff] %vm470, %v460
      %472 = vst.msk [vmem:[%s361 + $0x8] sm:$0xff] %vm470, %v461
      %473 = vst.msk [vmem:[%s369] sm:$0xff] %vm470, %v468
      %474 = vst.msk [vmem:[%s369 + $0x8] sm:$0xff] %vm470, %v469
      %p475 = scmp.lt.s32.totalorder %s22, 1
      %s476 = scalar_select %p475, %s22, 1
      %p477 = scmp.lt.s32.totalorder %s21, 0
      %s478 = scalar_select %p477, %s21, 0
      %s479 = smul.addr %s476, 2
      %s480 = sadd.s32 %s478, %s479
      %s481 = smul.addr %s480, 8
      %s482 = scalar_lea.vmem %s4, %s481
      %p483 = scmp.lt.s32.totalorder %s22, 1
      %s484 = scalar_select %p483, %s22, 1
      %p485 = scmp.lt.s32.totalorder %s21, 0
      %s486 = scalar_select %p485, %s21, 0
      %s487 = smul.addr %s484, 2
      %s488 = sadd.s32 %s486, %s487
      %s489 = smul.addr %s488, 8
      %s490 = scalar_lea.vmem %s5, %s489
      // Predicated region
      $region37: #{_forward_impl.1} parent=35 // pred_check
        %p491 = pneg %p161
      $region38: #{_forward_impl.1} parent=35 // pred_check_branch
        %493 = sbr.rel (%p491) target = $region40
      $region39: #{_forward_impl.1} parent=35 // pred_region
        _
      $region40: #{_forward_impl.1} parent=35 // pred_fallthru
        _
      // Predicated region
      $region41: #{_forward_impl.1} parent=35 // pred_check
        %p494 = pneg %p189
      $region42: #{_forward_impl.1} parent=35 // pred_check_branch
        %496 = sbr.rel (%p494) target = $region44
      $region43: #{_forward_impl.1} parent=35 // pred_region
        _
      $region44: #{_forward_impl.1} parent=35 // pred_fallthru
        _
    $region36: #{_forward_impl.1} parent=5 // pred_fallthru
      _
    %p497 = scmp.le.s32.totalorder 2, %s12
    // Predicated region
    $region45: #{_forward_impl.1} parent=5 // pred_check
      %p498 = pneg %p497
    $region46: #{_forward_impl.1} parent=5 // pred_check_branch
      %500 = sbr.rel (%p498) target = $region48
    $region47: #{_forward_impl.1} parent=5 // pred_region
      %s501 = ssub.s32 %s12, 2
      // Predicated region
      $region49: #{_forward_impl.1} parent=47 // pred_check
        %p502 = pneg %p167
      $region50: #{_forward_impl.1} parent=47 // pred_check_branch
        %504 = sbr.rel (%p502) target = $region52
      $region51: #{_forward_impl.1} parent=47 // pred_region
        %p505 = scmp.lt.s32.totalorder %s24, 1
        %s506 = scalar_select %p505, %s24, 1
        %p507 = scmp.lt.s32.totalorder %s23, 0
        %s508 = scalar_select %p507, %s23, 0
        %s509 = smul.addr %s506, 2
        %s510 = sadd.s32 %s508, %s509
        %s511 = smul.addr %s510, 8
        %s512 = scalar_lea.vmem %s4, %s511
      $region52: #{_forward_impl.1} parent=47 // pred_fallthru
        _
      // Predicated region
      $region53: #{_forward_impl.1} parent=47 // pred_check
        %p513 = pneg %p195
      $region54: #{_forward_impl.1} parent=47 // pred_check_branch
        %515 = sbr.rel (%p513) target = $region56
      $region55: #{_forward_impl.1} parent=47 // pred_region
        %p516 = scmp.lt.s32.totalorder %s24, 1
        %s517 = scalar_select %p516, %s24, 1
        %p518 = scmp.lt.s32.totalorder %s23, 0
        %s519 = scalar_select %p518, %s23, 0
        %s520 = smul.addr %s517, 2
        %s521 = sadd.s32 %s519, %s520
        %s522 = smul.addr %s521, 8
        %s523 = scalar_lea.vmem %s5, %s522
      $region56: #{_forward_impl.1} parent=47 // pred_fallthru
        _
    $region48: #{_forward_impl.1} parent=5 // pred_fallthru
      _
  $region6: #{_forward_impl.1} parent=0 // loop_footer
    %s16 = sadd.s32 1, %s12
  $region7: #{_forward_impl.1} parent=0 // loop_footer_branch
    %11 = sbr.rel target = $region3
  $region8: #{_forward_impl.1} parent=0 // loop_exit
    _

// kernel: reverse.1
$region0: #{reverse.1}
  %s0 = inlined_call_operand.vmem [shape: f32[2,4,16,7], index: 0, kind: input, shape index: {}]
  %s1 = inlined_call_operand.vmem [shape: f32[2,4,16,7], index: 1, kind: output, shape index: {}]
  $region1: #{reverse.1} parent=0
    #allocation0 [shape = 'u8[65536]{0}', space=vmem, size = 0x10000, scoped, tag = 'operand span for operand 0']
    #allocation1 [shape = 'u8[32768]{0}', space=vmem, size = 0x8000, scoped, tag = 'operand span for operand 1']
    %s2 = scalar_lea.vmem [#allocation0], 8
    // Predicated region
    $region2: #{reverse.1} parent=1 // pred_check
      _
    $region3: #{reverse.1} parent=1 // pred_check_branch
      %4 = sbr.rel (0) target = $region5
    $region4: #{reverse.1} parent=1 // pred_region
      // Predicated region
      $region6: #{reverse.1} parent=4 // pred_check
        _
      $region7: #{reverse.1} parent=4 // pred_check_branch
        %6 = sbr.rel (0) target = $region9
      $region8: #{reverse.1} parent=4 // pred_region
        // Predicated region
        $region21: #{reverse.1} parent=8 // pred_check
          _
        $region22: #{reverse.1} parent=8 // pred_check_branch
          %36 = sbr.rel (0) target = $region24
        $region23: #{reverse.1} parent=8 // pred_region
          loop: start=0, step=1, limit=1
          $region25: #{reverse.1} parent=23 // loop_pre_header
            _
          $region26: #{reverse.1} parent=23 // loop_header
            %s38 = sphi 0, %s42
            %p39 = scmp.ge.s32.totalorder %s38, 1
            %s43 = sphi %s0, %s0
            %s44 = sphi %s2, %s2
          $region27: #{reverse.1} parent=23 // loop_header_branch
            %41 = sbr.rel (%p39) target = $region31
          $region28: #{reverse.1} parent=23 // loop_body
            %v45 = vld [vmem:[%s43] sm:$0xff]
            %46 = vst [vmem:[%s44] sm:$0xff] %v45
            %v47 = vld [vmem:[%s43 + $0x8] sm:$0xff]
            %48 = vst [vmem:[%s44 + $0x10] sm:$0xff] %v47
            %v49 = vld [vmem:[%s43 + $0x10] sm:$0xff]
            %50 = vst [vmem:[%s44 + $0x20] sm:$0xff] %v49
            %v51 = vld [vmem:[%s43 + $0x18] sm:$0xff]
            %52 = vst [vmem:[%s44 + $0x30] sm:$0xff] %v51
            %v53 = vld [vmem:[%s43 + $0x20] sm:$0xff]
            %54 = vst [vmem:[%s44 + $0x40] sm:$0xff] %v53
            %v55 = vld [vmem:[%s43 + $0x28] sm:$0xff]
            %56 = vst [vmem:[%s44 + $0x50] sm:$0xff] %v55
            %v57 = vld [vmem:[%s43 + $0x30] sm:$0xff]
            %58 = vst [vmem:[%s44 + $0x60] sm:$0xff] %v57
            %v59 = vld [vmem:[%s43 + $0x38] sm:$0xff]
            %60 = vst [vmem:[%s44 + $0x70] sm:$0xff] %v59
          $region29: #{reverse.1} parent=23 // loop_footer
            %s42 = sadd.s32 1, %s38
          $region30: #{reverse.1} parent=23 // loop_footer_branch
            %37 = sbr.rel target = $region26
          $region31: #{reverse.1} parent=23 // loop_exit
            _
        $region24: #{reverse.1} parent=8 // pred_fallthru
          _
        // Predicated region
        $region32: #{reverse.1} parent=8 // pred_check
          _
        $region33: #{reverse.1} parent=8 // pred_check_branch
          %62 = sbr.rel target = $region35
        $region34: #{reverse.1} parent=8 // pred_region
          _
        $region35: #{reverse.1} parent=8 // pred_fallthru
          _
      $region9: #{reverse.1} parent=4 // pred_fallthru
        _
      // Predicated region
      $region10: #{reverse.1} parent=4 // pred_check
        _
      $region11: #{reverse.1} parent=4 // pred_check_branch
        %8 = sbr.rel target = $region13
      $region12: #{reverse.1} parent=4 // pred_region
        %s10 = ssub.s32 256, 1
        loop: start=0, step=1, limit=1
        $region14: #{reverse.1} parent=12 // loop_pre_header
          _
        $region15: #{reverse.1} parent=12 // loop_header
          %s12 = sphi 0, %s16
          %p13 = scmp.ge.s32.totalorder %s12, 1
          %s17 = sphi %s0, %s0
          %s18 = sphi %s2, %s2
        $region16: #{reverse.1} parent=12 // loop_header_branch
          %15 = sbr.rel (%p13) target = $region20
        $region17: #{reverse.1} parent=12 // loop_body
          %v19 = vld [vmem:[%s17] sm:%s10]
          %20 = vst [vmem:[%s18] sm:%s10] %v19
          %v21 = vld [vmem:[%s17 + $0x8] sm:%s10]
          %22 = vst [vmem:[%s18 + $0x10] sm:%s10] %v21
          %v23 = vld [vmem:[%s17 + $0x10] sm:%s10]
          %24 = vst [vmem:[%s18 + $0x20] sm:%s10] %v23
          %v25 = vld [vmem:[%s17 + $0x18] sm:%s10]
          %26 = vst [vmem:[%s18 + $0x30] sm:%s10] %v25
          %v27 = vld [vmem:[%s17 + $0x20] sm:%s10]
          %28 = vst [vmem:[%s18 + $0x40] sm:%s10] %v27
          %v29 = vld [vmem:[%s17 + $0x28] sm:%s10]
          %30 = vst [vmem:[%s18 + $0x50] sm:%s10] %v29
          %v31 = vld [vmem:[%s17 + $0x30] sm:%s10]
          %32 = vst [vmem:[%s18 + $0x60] sm:%s10] %v31
          %v33 = vld [vmem:[%s17 + $0x38] sm:%s10]
          %34 = vst [vmem:[%s18 + $0x70] sm:%s10] %v33
        $region18: #{reverse.1} parent=12 // loop_footer
          %s16 = sadd.s32 1, %s12
        $region19: #{reverse.1} parent=12 // loop_footer_branch
          %11 = sbr.rel target = $region15
        $region20: #{reverse.1} parent=12 // loop_exit
          _
      $region13: #{reverse.1} parent=4 // pred_fallthru
        _
    $region5: #{reverse.1} parent=1 // pred_fallthru
      _
    %63 = vnop
    %s64 = scalar_lea.vmem [#allocation0], 7
    %v65 = vld [vmem:[%s64] ss:$-1 sm:$0xff]
    %v66 = vrot.slane %v65, 1
    %67 = vst [vmem:[#allocation1] sm:$0xff] %v66
    %s68 = scalar_lea.vmem [#allocation0], 8
    %s69 = scalar_lea.vmem %s68, 7 [#allocation0]
    %v70 = vld [vmem:[%s69] ss:$-1 sm:$0xff]
    %v71 = vrot.slane %v70, 1
    %v72 = vlaneseq
    %v73 = vshrl.u32 %v72, 7
    %vm74 = vcmp.lt.s32.totalorder %v73, 7
    %75 = vst.msk [vmem:[#allocation1] sm:$0xff] %vm74, %v71
    %s76 = scalar_lea.vmem [#allocation1], 8
    %s77 = scalar_lea.vmem [#allocation0], 16
    %s78 = scalar_lea.vmem %s77, 7 [#allocation0]
    %v79 = vld [vmem:[%s78] ss:$-1 sm:$0xff]
    %v80 = vrot.slane %v79, 1
    %81 = vst [vmem:[%s76] sm:$0xff] %v80
    %s82 = scalar_lea.vmem %s77, 8 [#allocation0]
    %s83 = scalar_lea.vmem %s82, 7 [#allocation0]
    %v84 = vld [vmem:[%s83] ss:$-1 sm:$0xff]
    %v85 = vrot.slane %v84, 1
    %v86 = vlaneseq
    %v87 = vshrl.u32 %v86, 7
    %vm88 = vcmp.lt.s32.totalorder %v87, 7
    %89 = vst.msk [vmem:[%s76] sm:$0xff] %vm88, %v85
    %s90 = scalar_lea.vmem [#allocation1], 16
    %s91 = scalar_lea.vmem [#allocation0], 32
    %s92 = scalar_lea.vmem %s91, 7 [#allocation0]
    %v93 = vld [vmem:[%s92] ss:$-1 sm:$0xff]
    %v94 = vrot.slane %v93, 1
    %95 = vst [vmem:[%s90] sm:$0xff] %v94
    %s96 = scalar_lea.vmem %s91, 8 [#allocation0]
    %s97 = scalar_lea.vmem %s96, 7 [#allocation0]
    %v98 = vld [vmem:[%s97] ss:$-1 sm:$0xff]
    %v99 = vrot.slane %v98, 1
    %v100 = vlaneseq
    %v101 = vshrl.u32 %v100, 7
    %vm102 = vcmp.lt.s32.totalorder %v101, 7
    %103 = vst.msk [vmem:[%s90] sm:$0xff] %vm102, %v99
    %s104 = scalar_lea.vmem [#allocation1], 24
    %s105 = scalar_lea.vmem [#allocation0], 48
    %s106 = scalar_lea.vmem %s105, 7 [#allocation0]
    %v107 = vld [vmem:[%s106] ss:$-1 sm:$0xff]
    %v108 = vrot.slane %v107, 1
    %109 = vst [vmem:[%s104] sm:$0xff] %v108
    %s110 = scalar_lea.vmem %s105, 8 [#allocation0]
    %s111 = scalar_lea.vmem %s110, 7 [#allocation0]
    %v112 = vld [vmem:[%s111] ss:$-1 sm:$0xff]
    %v113 = vrot.slane %v112, 1
    %v114 = vlaneseq
    %v115 = vshrl.u32 %v114, 7
    %vm116 = vcmp.lt.s32.totalorder %v115, 7
    %117 = vst.msk [vmem:[%s104] sm:$0xff] %vm116, %v113
    %s118 = scalar_lea.vmem [#allocation1], 32
    %s119 = scalar_lea.vmem [#allocation0], 64
    %s120 = scalar_lea.vmem %s119, 7 [#allocation0]
    %v121 = vld [vmem:[%s120] ss:$-1 sm:$0xff]
    %v122 = vrot.slane %v121, 1
    %123 = vst [vmem:[%s118] sm:$0xff] %v122
    %s124 = scalar_lea.vmem %s119, 8 [#allocation0]
    %s125 = scalar_lea.vmem %s124, 7 [#allocation0]
    %v126 = vld [vmem:[%s125] ss:$-1 sm:$0xff]
    %v127 = vrot.slane %v126, 1
    %v128 = vlaneseq
    %v129 = vshrl.u32 %v128, 7
    %vm130 = vcmp.lt.s32.totalorder %v129, 7
    %131 = vst.msk [vmem:[%s118] sm:$0xff] %vm130, %v127
    %s132 = scalar_lea.vmem [#allocation1], 40
    %s133 = scalar_lea.vmem [#allocation0], 80
    %s134 = scalar_lea.vmem %s133, 7 [#allocation0]
    %v135 = vld [vmem:[%s134] ss:$-1 sm:$0xff]
    %v136 = vrot.slane %v135, 1
    %137 = vst [vmem:[%s132] sm:$0xff] %v136
    %s138 = scalar_lea.vmem %s133, 8 [#allocation0]
    %s139 = scalar_lea.vmem %s138, 7 [#allocation0]
    %v140 = vld [vmem:[%s139] ss:$-1 sm:$0xff]
    %v141 = vrot.slane %v140, 1
    %v142 = vlaneseq
    %v143 = vshrl.u32 %v142, 7
    %vm144 = vcmp.lt.s32.totalorder %v143, 7
    %145 = vst.msk [vmem:[%s132] sm:$0xff] %vm144, %v141
    %s146 = scalar_lea.vmem [#allocation1], 48
    %s147 = scalar_lea.vmem [#allocation0], 96
    %s148 = scalar_lea.vmem %s147, 7 [#allocation0]
    %v149 = vld [vmem:[%s148] ss:$-1 sm:$0xff]
    %v150 = vrot.slane %v149, 1
    %151 = vst [vmem:[%s146] sm:$0xff] %v150
    %s152 = scalar_lea.vmem %s147, 8 [#allocation0]
    %s153 = scalar_lea.vmem %s152, 7 [#allocation0]
    %v154 = vld [vmem:[%s153] ss:$-1 sm:$0xff]
    %v155 = vrot.slane %v154, 1
    %v156 = vlaneseq
    %v157 = vshrl.u32 %v156, 7
    %vm158 = vcmp.lt.s32.totalorder %v157, 7
    %159 = vst.msk [vmem:[%s146] sm:$0xff] %vm158, %v155
    %s160 = scalar_lea.vmem [#allocation1], 56
    %s161 = scalar_lea.vmem [#allocation0], 112
    %s162 = scalar_lea.vmem %s161, 7 [#allocation0]
    %v163 = vld [vmem:[%s162] ss:$-1 sm:$0xff]
    %v164 = vrot.slane %v163, 1
    %165 = vst [vmem:[%s160] sm:$0xff] %v164
    %s166 = scalar_lea.vmem %s161, 8 [#allocation0]
    %s167 = scalar_lea.vmem %s166, 7 [#allocation0]
    %v168 = vld [vmem:[%s167] ss:$-1 sm:$0xff]
    %v169 = vrot.slane %v168, 1
    %v170 = vlaneseq
    %v171 = vshrl.u32 %v170, 7
    %vm172 = vcmp.lt.s32.totalorder %v171, 7
    %173 = vst.msk [vmem:[%s160] sm:$0xff] %vm172, %v169
    // Predicated region
    $region36: #{reverse.1} parent=1 // pred_check
      _
    $region37: #{reverse.1} parent=1 // pred_check_branch
      %175 = sbr.rel (0) target = $region39
    $region38: #{reverse.1} parent=1 // pred_region
      // Predicated region
      $region40: #{reverse.1} parent=38 // pred_check
        _
      $region41: #{reverse.1} parent=38 // pred_check_branch
        %177 = sbr.rel (0) target = $region43
      $region42: #{reverse.1} parent=38 // pred_region
        // Predicated region
        $region55: #{reverse.1} parent=42 // pred_check
          _
        $region56: #{reverse.1} parent=42 // pred_check_branch
          %207 = sbr.rel (0) target = $region58
        $region57: #{reverse.1} parent=42 // pred_region
          loop: start=0, step=1, limit=1
          $region59: #{reverse.1} parent=57 // loop_pre_header
            _
          $region60: #{reverse.1} parent=57 // loop_header
            %s209 = sphi 0, %s213
            %p210 = scmp.ge.s32.totalorder %s209, 1
            %s214 = sphi [#allocation1], [#allocation1]
            %s215 = sphi %s1, %s1
          $region61: #{reverse.1} parent=57 // loop_header_branch
            %212 = sbr.rel (%p210) target = $region65
          $region62: #{reverse.1} parent=57 // loop_body
            %v216 = vld [vmem:[%s214] sm:$0xff]
            %217 = vst [vmem:[%s215] sm:$0xff] %v216
            %v218 = vld [vmem:[%s214 + $0x8] sm:$0xff]
            %219 = vst [vmem:[%s215 + $0x8] sm:$0xff] %v218
            %v220 = vld [vmem:[%s214 + $0x10] sm:$0xff]
            %221 = vst [vmem:[%s215 + $0x10] sm:$0xff] %v220
            %v222 = vld [vmem:[%s214 + $0x18] sm:$0xff]
            %223 = vst [vmem:[%s215 + $0x18] sm:$0xff] %v222
            %v224 = vld [vmem:[%s214 + $0x20] sm:$0xff]
            %225 = vst [vmem:[%s215 + $0x20] sm:$0xff] %v224
            %v226 = vld [vmem:[%s214 + $0x28] sm:$0xff]
            %227 = vst [vmem:[%s215 + $0x28] sm:$0xff] %v226
            %v228 = vld [vmem:[%s214 + $0x30] sm:$0xff]
            %229 = vst [vmem:[%s215 + $0x30] sm:$0xff] %v228
            %v230 = vld [vmem:[%s214 + $0x38] sm:$0xff]
            %231 = vst [vmem:[%s215 + $0x38] sm:$0xff] %v230
          $region63: #{reverse.1} parent=57 // loop_footer
            %s213 = sadd.s32 1, %s209
          $region64: #{reverse.1} parent=57 // loop_footer_branch
            %208 = sbr.rel target = $region60
          $region65: #{reverse.1} parent=57 // loop_exit
            _
        $region58: #{reverse.1} parent=42 // pred_fallthru
          _
        // Predicated region
        $region66: #{reverse.1} parent=42 // pred_check
          _
        $region67: #{reverse.1} parent=42 // pred_check_branch
          %233 = sbr.rel target = $region69
        $region68: #{reverse.1} parent=42 // pred_region
          _
        $region69: #{reverse.1} parent=42 // pred_fallthru
          _
      $region43: #{reverse.1} parent=38 // pred_fallthru
        _
      // Predicated region
      $region44: #{reverse.1} parent=38 // pred_check
        _
      $region45: #{reverse.1} parent=38 // pred_check_branch
        %179 = sbr.rel target = $region47
      $region46: #{reverse.1} parent=38 // pred_region
        %s181 = ssub.s32 256, 1
        loop: start=0, step=1, limit=1
        $region48: #{reverse.1} parent=46 // loop_pre_header
          _
        $region49: #{reverse.1} parent=46 // loop_header
          %s183 = sphi 0, %s187
          %p184 = scmp.ge.s32.totalorder %s183, 1
          %s188 = sphi [#allocation1], [#allocation1]
          %s189 = sphi %s1, %s1
        $region50: #{reverse.1} parent=46 // loop_header_branch
          %186 = sbr.rel (%p184) target = $region54
        $region51: #{reverse.1} parent=46 // loop_body
          %v190 = vld [vmem:[%s188] sm:%s181]
          %191 = vst [vmem:[%s189] sm:%s181] %v190
          %v192 = vld [vmem:[%s188 + $0x8] sm:%s181]
          %193 = vst [vmem:[%s189 + $0x8] sm:%s181] %v192
          %v194 = vld [vmem:[%s188 + $0x10] sm:%s181]
          %195 = vst [vmem:[%s189 + $0x10] sm:%s181] %v194
          %v196 = vld [vmem:[%s188 + $0x18] sm:%s181]
          %197 = vst [vmem:[%s189 + $0x18] sm:%s181] %v196
          %v198 = vld [vmem:[%s188 + $0x20] sm:%s181]
          %199 = vst [vmem:[%s189 + $0x20] sm:%s181] %v198
          %v200 = vld [vmem:[%s188 + $0x28] sm:%s181]
          %201 = vst [vmem:[%s189 + $0x28] sm:%s181] %v200
          %v202 = vld [vmem:[%s188 + $0x30] sm:%s181]
          %203 = vst [vmem:[%s189 + $0x30] sm:%s181] %v202
          %v204 = vld [vmem:[%s188 + $0x38] sm:%s181]
          %205 = vst [vmem:[%s189 + $0x38] sm:%s181] %v204
        $region52: #{reverse.1} parent=46 // loop_footer
          %s187 = sadd.s32 1, %s183
        $region53: #{reverse.1} parent=46 // loop_footer_branch
          %182 = sbr.rel target = $region49
        $region54: #{reverse.1} parent=46 // loop_exit
          _
      $region47: #{reverse.1} parent=38 // pred_fallthru
        _
    $region39: #{reverse.1} parent=1 // pred_fallthru
      _
    %234 = vnop

</llo_original>
